<compile_context>
chip_gen: v6e
topology: v6e:2x2x1
jax: 0.10.0
libtpu: 0.0.40
codegen_flags: <defaults>
</compile_context>

<pallas_src>
import jax
import jax.numpy as jnp
from jax.experimental import pallas as pl
from jax.experimental.pallas import tpu as pltpu

_LANE = 128      # lane width (last dim)
_SUBLANE = 8     # sublane width (second-last dim, f32)


def _round_up(n, m):
    return ((n + m - 1) // m) * m


def _pad2d(a, rows, cols):
    r, c = a.shape
    return jnp.pad(a, ((0, rows - r), (0, cols - c)))


def _bnn_fused_kernel(x_ref, w1_ref, aux1_ref, w2_ref, aux2_ref, o_ref):
    """Fused BayesianLayer(relu) -> BayesianLayer(sigmoid) on one batch tile.

    w{1,2}_ref : (2, K_p, N_p) bf16, [0]=mu, [1]=softplus(rho)^2
    aux{1,2}_ref: (8, N_p) f32,  row0=b_mu, row1=softplus(b_rho)^2, row2=eps
    """
    x = x_ref[...]                                   # [TB, Din_p] f32
    x_bf = x.astype(jnp.bfloat16)
    xsq_bf = (x * x).astype(jnp.bfloat16)

    # ---------------- layer 1 (relu) ----------------
    gamma1 = (jnp.dot(x_bf, w1_ref[0], preferred_element_type=jnp.float32)
              + aux1_ref[0:1, :])
    delta1 = (jnp.dot(xsq_bf, w1_ref[1], preferred_element_type=jnp.float32)
              + aux1_ref[1:2, :])
    h = jnp.maximum(gamma1 + jnp.sqrt(delta1) * aux1_ref[2:3, :], 0.0)

    # ---------------- layer 2 (sigmoid) ----------------
    h_bf = h.astype(jnp.bfloat16)
    hsq_bf = (h * h).astype(jnp.bfloat16)
    gamma2 = (jnp.dot(h_bf, w2_ref[0], preferred_element_type=jnp.float32)
              + aux2_ref[0:1, :])
    delta2 = (jnp.dot(hsq_bf, w2_ref[1], preferred_element_type=jnp.float32)
              + aux2_ref[1:2, :])
    act = gamma2 + jnp.sqrt(delta2) * aux2_ref[2:3, :]
    # Exact sigmoid via a single EUP tanh pass: sigmoid(x) = 0.5*(tanh(x/2)+1)
    o_ref[...] = 0.5 * jnp.tanh(0.5 * act) + 0.5


@jax.jit
def bnn_forward(x, params1, params2, eps1, eps2):
    """BNN.forward with nonlin=True: BayesianLayer(relu) -> BayesianLayer(sigmoid)."""
    B = x.shape[0]
    x = x.reshape(B, -1).astype(jnp.float32)                  # input.view(B, -1)
    d_in, d_h = params1["mu"].shape
    d_out = params2["mu"].shape[1]

    # lane-dense padded feature sizes
    din_p = _round_up(d_in, _LANE)
    dh_p = _round_up(d_h, _LANE)
    dout_p = _round_up(d_out, _LANE)

    # Batch tile: large tiles amortize per-step overhead, but once B >= 16 we
    # keep >= 2 grid steps so the "parallel" axis can feed both v7x cores.
    if B >= 16:
        tb = min(_round_up(pl.cdiv(B, 2), _SUBLANE), 512)
    else:
        tb = _round_up(B, _SUBLANE)
    bp = _round_up(B, tb)

    # Precompute sigma^2 = softplus(rho)^2 (numerically stable, f32) OUTSIDE
    # the kernel; store matmul weights as bf16, aux (bias/eps) rows as f32.
    def prep(p, eps_l, dk_p, dn, dn_p):
        mu = _pad2d(p["mu"].astype(jnp.float32), dk_p, dn_p)
        sig_sq = _pad2d(jnp.square(jax.nn.softplus(p["rho"].astype(jnp.float32))),
                        dk_p, dn_p)
        w = jnp.stack([mu, sig_sq]).astype(jnp.bfloat16)      # (2, K_p, N_p)
        aux = jnp.zeros((_SUBLANE, dn_p), jnp.float32)
        aux = aux.at[0, :dn].set(p["b_mu"].reshape(dn).astype(jnp.float32))
        aux = aux.at[1, :dn].set(
            jnp.square(jax.nn.softplus(p["b_rho"].reshape(dn).astype(jnp.float32))))
        aux = aux.at[2, :dn].set(eps_l.reshape(dn).astype(jnp.float32))
        return w, aux

    w1, aux1 = prep(params1, eps1, din_p, d_h, dh_p)
    w2, aux2 = prep(params2, eps2, dh_p, d_out, dout_p)
    x_p = _pad2d(x, bp, din_p)

    # Constant-index blocks stay resident across batch tiles; Buffered(1)
    # avoids pointlessly double-buffering them.
    def const_spec(shape):
        return pl.BlockSpec(shape, lambda b: (0,) * len(shape),
                            pipeline_mode=pl.Buffered(1))

    # Cost estimate (2 matmuls per layer, 2*M*K*N flops each).
    flops = 4 * bp * din_p * dh_p + 4 * bp * dh_p * dout_p
    transcendentals = bp * (dh_p + 2 * dout_p)                 # sqrt + tanh passes
    bytes_accessed = ((x_p.size + bp * dout_p) * 4
                      + (w1.size + w2.size) * 2
                      + (aux1.size + aux2.size) * 4)

    # Explicit scoped-VMEM budget: single-buffered weights + double-buffered
    # x/out tiles + in-kernel temporaries, with headroom.
    w_bytes = (w1.size + w2.size) * 2
    io_bytes = 2 * tb * (din_p + dout_p) * 4
    tmp_bytes = 6 * tb * max(din_p, dh_p, dout_p) * 4
    vmem_limit = int(1.5 * (w_bytes + io_bytes + tmp_bytes
                            + (aux1.size + aux2.size) * 4))
    vmem_limit = min(max(vmem_limit, 32 * 1024 * 1024), 100 * 1024 * 1024)

    out_p = pl.pallas_call(
        _bnn_fused_kernel,
        out_shape=jax.ShapeDtypeStruct((bp, dout_p), jnp.float32),
        grid=(bp // tb,),
        in_specs=[
            pl.BlockSpec((tb, din_p), lambda b: (b, 0)),       # x batch tile
            const_spec((2, din_p, dh_p)),                      # [mu1, sigma1^2]
            const_spec((_SUBLANE, dh_p)),                      # b1_mu / b1_sig^2 / eps1
            const_spec((2, dh_p, dout_p)),                     # [mu2, sigma2^2]
            const_spec((_SUBLANE, dout_p)),                    # b2_mu / b2_sig^2 / eps2
        ],
        out_specs=pl.BlockSpec((tb, dout_p), lambda b: (b, 0)),
        compiler_params=pltpu.CompilerParams(
            dimension_semantics=("parallel",),
            vmem_limit_bytes=vmem_limit),
        cost_estimate=pl.CostEstimate(
            flops=flops, transcendentals=transcendentals,
            bytes_accessed=bytes_accessed),
    )(x_p, w1, aux1, w2, aux2)

    return out_p[:B, :d_out]


def init_bayesian_layer(key, num_inputs, num_outputs, prior_sd=0.1):
    """Deterministic parameter init mirroring BayesianLayer.__init__."""
    k_mu, k_bmu = jax.random.split(key)
    prior_rho = jnp.log(jnp.exp(jnp.float32(prior_sd)) - 1.0)  # std_to_log
    mu = jax.random.normal(k_mu, (num_inputs, num_outputs), jnp.float32)
    rho = jnp.full((num_inputs, num_outputs), prior_rho, jnp.float32)
    b_mu = jax.random.normal(k_bmu, (1, num_outputs), jnp.float32)
    b_rho = jnp.full((1, num_outputs), prior_rho, jnp.float32)
    return dict(mu=mu, rho=rho, b_mu=b_mu, b_rho=b_rho)


def _reference_layer(x, p, eps, nonlin):
    sigma = jax.nn.softplus(p["rho"])
    b_sigma = jax.nn.softplus(p["b_rho"]).reshape(1, -1)
    gamma = x @ p["mu"] + p["b_mu"].reshape(1, -1)
    delta = (x * x) @ (sigma * sigma) + b_sigma * b_sigma
    act = gamma + jnp.sqrt(delta) * eps.reshape(1, -1)
    return jnp.maximum(act, 0.0) if nonlin == "relu" else jax.nn.sigmoid(act)


if __name__ == "__main__":
    B, N_IN, N_HID, N_OUT = 8, 16, 32, 8

    root = jax.random.PRNGKey(0)
    k1, k2, kx, ke1, ke2 = jax.random.split(root, 5)

    params1 = init_bayesian_layer(k1, N_IN, N_HID)
    params2 = init_bayesian_layer(k2, N_HID, N_OUT)

    x = jax.random.normal(kx, (B, N_IN), jnp.float32)
    # epsilon noise of get_output_for_reparametrization: per-output, broadcast
    # over the batch (matches the reference module's expand_as semantics).
    eps1 = jax.random.normal(ke1, (1, N_HID), jnp.float32)
    eps2 = jax.random.normal(ke2, (1, N_OUT), jnp.float32)

    out = bnn_forward(x, params1, params2, eps1, eps2)
    out = jax.block_until_ready(out)

    # Sanity-check against a plain-JAX f32 reference. Tolerance absorbs the
    # bf16 quantization of the MXU matmul operands (elementwise path is f32).
    h_ref = _reference_layer(x, params1, eps1, "relu")
    out_ref = _reference_layer(h_ref, params2, eps2, "sigmoid")
    assert out.shape == (B, N_OUT)
    assert jnp.allclose(out, out_ref, atol=3e-2, rtol=3e-2), float(
        jnp.max(jnp.abs(out - out_ref)))

    print("KERNEL_OK")
</pallas_src>

<mosaic_0001>
module attributes {stable_mosaic.version = 11 : i64} {
  func.func @_bnn_fused_kernel(%arg0: i32, %arg1: memref<8x128xf32, #tpu.memory_space<vmem>>, %arg2: memref<2x128x128xbf16, #tpu.memory_space<vmem>>, %arg3: memref<8x128xf32, #tpu.memory_space<vmem>>, %arg4: memref<2x128x128xbf16, #tpu.memory_space<vmem>>, %arg5: memref<8x128xf32, #tpu.memory_space<vmem>>, %arg6: memref<8x128xf32, #tpu.memory_space<vmem>>) attributes {dimension_semantics = [#tpu.dimension_semantics<parallel>], iteration_bounds = array<i64: 1>, scalar_prefetch = 0 : i64, scratch_operands = 0 : i64, tpu.core_type = #tpu.core_type<tc>, window_params = [{transform_indices = @transform_0, window_bounds = array<i64: 8, 128>}, {pipeline_mode = #tpu.pipeline_mode<synchronous>, transform_indices = @transform_1, window_bounds = array<i64: 2, 128, 128>}, {pipeline_mode = #tpu.pipeline_mode<synchronous>, transform_indices = @transform_2, window_bounds = array<i64: 8, 128>}, {pipeline_mode = #tpu.pipeline_mode<synchronous>, transform_indices = @transform_3, window_bounds = array<i64: 2, 128, 128>}, {pipeline_mode = #tpu.pipeline_mode<synchronous>, transform_indices = @transform_4, window_bounds = array<i64: 8, 128>}, {transform_indices = @transform_5, window_bounds = array<i64: 8, 128>}]} {
    %c0 = arith.constant 0 : index
    %c0_0 = arith.constant 0 : index
    %0 = vector.load %arg1[%c0, %c0_0] : memref<8x128xf32, #tpu.memory_space<vmem>>, vector<8x128xf32>
    %1 = arith.truncf %0 : vector<8x128xf32> to vector<8x128xbf16>
    %2 = arith.mulf %0, %0 : vector<8x128xf32>
    %3 = arith.truncf %2 : vector<8x128xf32> to vector<8x128xbf16>
    %c0_1 = arith.constant 0 : index
    %c0_2 = arith.constant 0 : index
    %c0_3 = arith.constant 0 : index
    %4 = vector.load %arg2[%c0_1, %c0_2, %c0_3] : memref<2x128x128xbf16, #tpu.memory_space<vmem>>, vector<1x128x128xbf16>
    %5 = vector.shape_cast %4 : vector<1x128x128xbf16> to vector<128x128xbf16>
    %cst = arith.constant dense<0.000000e+00> : vector<8x128xf32>
    %6 = tpu.matmul %1, %5, %cst {dimension_numbers = #tpu.dot_dimension_numbers<[1], [0], [0], [1], [0, 0, 1, 1], [], []>} : vector<8x128xbf16>, vector<128x128xbf16>, vector<8x128xf32> -> vector<8x128xf32>
    %c0_4 = arith.constant 0 : index
    %c0_5 = arith.constant 0 : index
    %7 = vector.load %arg3[%c0_4, %c0_5] : memref<8x128xf32, #tpu.memory_space<vmem>>, vector<1x128xf32>
    %8 = vector.broadcast %7 : vector<1x128xf32> to vector<8x128xf32>
    %9 = arith.addf %6, %8 : vector<8x128xf32>
    %c1 = arith.constant 1 : index
    %c0_6 = arith.constant 0 : index
    %c0_7 = arith.constant 0 : index
    %10 = vector.load %arg2[%c1, %c0_6, %c0_7] : memref<2x128x128xbf16, #tpu.memory_space<vmem>>, vector<1x128x128xbf16>
    %11 = vector.shape_cast %10 : vector<1x128x128xbf16> to vector<128x128xbf16>
    %cst_8 = arith.constant dense<0.000000e+00> : vector<8x128xf32>
    %12 = tpu.matmul %3, %11, %cst_8 {dimension_numbers = #tpu.dot_dimension_numbers<[1], [0], [0], [1], [0, 0, 1, 1], [], []>} : vector<8x128xbf16>, vector<128x128xbf16>, vector<8x128xf32> -> vector<8x128xf32>
    %c1_9 = arith.constant 1 : index
    %c0_10 = arith.constant 0 : index
    %13 = vector.load %arg3[%c1_9, %c0_10] : memref<8x128xf32, #tpu.memory_space<vmem>>, vector<1x128xf32>
    %14 = vector.broadcast %13 : vector<1x128xf32> to vector<8x128xf32>
    %15 = arith.addf %12, %14 : vector<8x128xf32>
    %16 = math.sqrt %15 : vector<8x128xf32>
    %c2 = arith.constant 2 : index
    %c0_11 = arith.constant 0 : index
    %17 = vector.load %arg3[%c2, %c0_11] : memref<8x128xf32, #tpu.memory_space<vmem>>, vector<1x128xf32>
    %18 = vector.broadcast %17 : vector<1x128xf32> to vector<8x128xf32>
    %19 = arith.mulf %16, %18 : vector<8x128xf32>
    %20 = arith.addf %9, %19 : vector<8x128xf32>
    %cst_12 = arith.constant 0.000000e+00 : f32
    %21 = vector.broadcast %cst_12 : f32 to vector<8x128xf32>
    %22 = arith.maximumf %20, %21 : vector<8x128xf32>
    %23 = arith.truncf %22 : vector<8x128xf32> to vector<8x128xbf16>
    %24 = arith.mulf %22, %22 : vector<8x128xf32>
    %25 = arith.truncf %24 : vector<8x128xf32> to vector<8x128xbf16>
    %c0_13 = arith.constant 0 : index
    %c0_14 = arith.constant 0 : index
    %c0_15 = arith.constant 0 : index
    %26 = vector.load %arg4[%c0_13, %c0_14, %c0_15] : memref<2x128x128xbf16, #tpu.memory_space<vmem>>, vector<1x128x128xbf16>
    %27 = vector.shape_cast %26 : vector<1x128x128xbf16> to vector<128x128xbf16>
    %cst_16 = arith.constant dense<0.000000e+00> : vector<8x128xf32>
    %28 = tpu.matmul %23, %27, %cst_16 {dimension_numbers = #tpu.dot_dimension_numbers<[1], [0], [0], [1], [0, 0, 1, 1], [], []>} : vector<8x128xbf16>, vector<128x128xbf16>, vector<8x128xf32> -> vector<8x128xf32>
    %c0_17 = arith.constant 0 : index
    %c0_18 = arith.constant 0 : index
    %29 = vector.load %arg5[%c0_17, %c0_18] : memref<8x128xf32, #tpu.memory_space<vmem>>, vector<1x128xf32>
    %30 = vector.broadcast %29 : vector<1x128xf32> to vector<8x128xf32>
    %31 = arith.addf %28, %30 : vector<8x128xf32>
    %c1_19 = arith.constant 1 : index
    %c0_20 = arith.constant 0 : index
    %c0_21 = arith.constant 0 : index
    %32 = vector.load %arg4[%c1_19, %c0_20, %c0_21] : memref<2x128x128xbf16, #tpu.memory_space<vmem>>, vector<1x128x128xbf16>
    %33 = vector.shape_cast %32 : vector<1x128x128xbf16> to vector<128x128xbf16>
    %cst_22 = arith.constant dense<0.000000e+00> : vector<8x128xf32>
    %34 = tpu.matmul %25, %33, %cst_22 {dimension_numbers = #tpu.dot_dimension_numbers<[1], [0], [0], [1], [0, 0, 1, 1], [], []>} : vector<8x128xbf16>, vector<128x128xbf16>, vector<8x128xf32> -> vector<8x128xf32>
    %c1_23 = arith.constant 1 : index
    %c0_24 = arith.constant 0 : index
    %35 = vector.load %arg5[%c1_23, %c0_24] : memref<8x128xf32, #tpu.memory_space<vmem>>, vector<1x128xf32>
    %36 = vector.broadcast %35 : vector<1x128xf32> to vector<8x128xf32>
    %37 = arith.addf %34, %36 : vector<8x128xf32>
    %38 = math.sqrt %37 : vector<8x128xf32>
    %c2_25 = arith.constant 2 : index
    %c0_26 = arith.constant 0 : index
    %39 = vector.load %arg5[%c2_25, %c0_26] : memref<8x128xf32, #tpu.memory_space<vmem>>, vector<1x128xf32>
    %40 = vector.broadcast %39 : vector<1x128xf32> to vector<8x128xf32>
    %41 = arith.mulf %38, %40 : vector<8x128xf32>
    %42 = arith.addf %31, %41 : vector<8x128xf32>
    %cst_27 = arith.constant 5.000000e-01 : f32
    %43 = vector.broadcast %cst_27 : f32 to vector<8x128xf32>
    %44 = arith.mulf %43, %42 : vector<8x128xf32>
    %45 = math.tanh %44 : vector<8x128xf32>
    %cst_28 = arith.constant 5.000000e-01 : f32
    %46 = vector.broadcast %cst_28 : f32 to vector<8x128xf32>
    %47 = arith.mulf %46, %45 : vector<8x128xf32>
    %cst_29 = arith.constant 5.000000e-01 : f32
    %48 = vector.broadcast %cst_29 : f32 to vector<8x128xf32>
    %49 = arith.addf %47, %48 : vector<8x128xf32>
    %c0_30 = arith.constant 0 : index
    %c0_31 = arith.constant 0 : index
    %50 = vector.load %arg6[%c0_30, %c0_31] : memref<8x128xf32, #tpu.memory_space<vmem>>, vector<8x128xf32>
    tpu.vector_store %arg6[%c0_30, %c0_31], %49 {strides = array<i32>} : memref<8x128xf32, #tpu.memory_space<vmem>>, vector<8x128xf32>,
    return
  }
  func.func @transform_0(%arg0: i32) -> (i32, i32) {
    %c0_i32 = arith.constant 0 : i32
    %c0_i32_0 = arith.constant 0 : i32
    return %arg0, %c0_i32 : i32, i32
  }
  func.func @transform_1(%arg0: i32) -> (i32, i32, i32) {
    %c0_i32 = arith.constant 0 : i32
    %c0_i32_0 = arith.constant 0 : i32
    %c0_i32_1 = arith.constant 0 : i32
    %c0_i32_2 = arith.constant 0 : i32
    return %c0_i32, %c0_i32_0, %c0_i32_1 : i32, i32, i32
  }
  func.func @transform_2(%arg0: i32) -> (i32, i32) {
    %c0_i32 = arith.constant 0 : i32
    %c0_i32_0 = arith.constant 0 : i32
    %c0_i32_1 = arith.constant 0 : i32
    return %c0_i32, %c0_i32_0 : i32, i32
  }
  func.func @transform_3(%arg0: i32) -> (i32, i32, i32) {
    %c0_i32 = arith.constant 0 : i32
    %c0_i32_0 = arith.constant 0 : i32
    %c0_i32_1 = arith.constant 0 : i32
    %c0_i32_2 = arith.constant 0 : i32
    return %c0_i32, %c0_i32_0, %c0_i32_1 : i32, i32, i32
  }
  func.func @transform_4(%arg0: i32) -> (i32, i32) {
    %c0_i32 = arith.constant 0 : i32
    %c0_i32_0 = arith.constant 0 : i32
    %c0_i32_1 = arith.constant 0 : i32
    return %c0_i32, %c0_i32_0 : i32, i32
  }
  func.func @transform_5(%arg0: i32) -> (i32, i32) {
    %c0_i32 = arith.constant 0 : i32
    %c0_i32_0 = arith.constant 0 : i32
    return %arg0, %c0_i32 : i32, i32
  }
}

</mosaic_0001>

<llo_original>
// kernel: bnn_forward.1
$region0: #{bnn_forward.1}
  #allocation0 [shape = 'u32[]', space=smem, size = 0x4, offset = 0x4, fixed_abs, tag = 'smem constant byte address 0x4 - core index']
  #allocation1 [shape = 'u32[144,128]{1,0:T(1,128)}', space=vmem, size = 0x12000, scoped, tag = 'internal scratch']
  %s0 = inlined_call_operand.vmem [shape: f32[8,128], index: 0, kind: input, shape index: {}]
  %s1 = inlined_call_operand.vmem [shape: bf16[2,128,128], index: 1, kind: input, shape index: {}]
  %s2 = inlined_call_operand.vmem [shape: f32[8,128], index: 2, kind: input, shape index: {}]
  %s3 = inlined_call_operand.vmem [shape: bf16[2,128,128], index: 3, kind: input, shape index: {}]
  %s4 = inlined_call_operand.vmem [shape: f32[8,128], index: 4, kind: input, shape index: {}]
  %s5 = inlined_call_operand.hbm [shape: f32[8,128], index: 5, kind: output, shape index: {}]
  %s6 = sld [smem:[#allocation0]]
  $region30: #{bnn_forward.1} parent=0
    _
  %s8 = ssub.s32 1, %s6
  %s9 = scalar_select 0, %s8, %s6
  $region1: #{bnn_forward.1} parent=0
    #allocation2 [shape = 'u8[4096]{0}', space=vmem, size = 0x1000, scoped, tag = 'output window, operand 0, single buffered']
    #allocation3 [shape = 's32[1]{0}', space=sflag, size = 0x4, scoped, tag = 'scoped memory for bnn_forward.1']
    %10 = vsyncpa [#allocation3], 0
    // Predicated region
    $region2: #{bnn_forward.1} parent=1 // pred_check
      _
    $region3: #{bnn_forward.1} parent=1 // pred_check_branch
      %12 = sbr.rel (0) target = $region5
    $region4: #{bnn_forward.1} parent=1 // pred_region
      _
    $region5: #{bnn_forward.1} parent=1 // pred_fallthru
      _
    // Predicated region
    $region6: #{bnn_forward.1} parent=1 // pred_check
      _
    $region7: #{bnn_forward.1} parent=1 // pred_check_branch
      %14 = sbr.rel (0) target = $region9
    $region8: #{bnn_forward.1} parent=1 // pred_region
      _
    $region9: #{bnn_forward.1} parent=1 // pred_fallthru
      _
    // Predicated region
    $region10: #{bnn_forward.1} parent=1 // pred_check
      _
    $region11: #{bnn_forward.1} parent=1 // pred_check_branch
      %16 = sbr.rel (0) target = $region13
    $region12: #{bnn_forward.1} parent=1 // pred_region
      _
    $region13: #{bnn_forward.1} parent=1 // pred_fallthru
      _
    // Predicated region
    $region14: #{bnn_forward.1} parent=1 // pred_check
      _
    $region15: #{bnn_forward.1} parent=1 // pred_check_branch
      %18 = sbr.rel (0) target = $region17
    $region16: #{bnn_forward.1} parent=1 // pred_region
      _
    $region17: #{bnn_forward.1} parent=1 // pred_fallthru
      _
    // Predicated region
    $region18: #{bnn_forward.1} parent=1 // pred_check
      _
    $region19: #{bnn_forward.1} parent=1 // pred_check_branch
      %20 = sbr.rel (0) target = $region21
    $region20: #{bnn_forward.1} parent=1 // pred_region
      _
    $region21: #{bnn_forward.1} parent=1 // pred_fallthru
      _
    %v22 = vld [vmem:[%s0] sm:$0xff]
    %v23 = vpack.c.bf16 %v22, %v22
    %v24 = vmul.f32 %v22, %v22
    %v25 = vpack.c.bf16 %v24, %v24
    %v26 = vld [vmem:[%s1] sm:$0xf]
    %v27 = vld [vmem:[%s1 + $0x4] sm:$0xf]
    %v28 = vld [vmem:[%s1 + $0x8] sm:$0xf]
    %v29 = vld [vmem:[%s1 + $0xc] sm:$0xf]
    %v30 = vld [vmem:[%s1 + $0x10] sm:$0xf]
    %v31 = vld [vmem:[%s1 + $0x14] sm:$0xf]
    %v32 = vld [vmem:[%s1 + $0x18] sm:$0xf]
    %v33 = vld [vmem:[%s1 + $0x1c] sm:$0xf]
    %v34 = vld [vmem:[%s1 + $0x20] sm:$0xf]
    %v35 = vld [vmem:[%s1 + $0x24] sm:$0xf]
    %v36 = vld [vmem:[%s1 + $0x28] sm:$0xf]
    %v37 = vld [vmem:[%s1 + $0x2c] sm:$0xf]
    %v38 = vld [vmem:[%s1 + $0x30] sm:$0xf]
    %v39 = vld [vmem:[%s1 + $0x34] sm:$0xf]
    %v40 = vld [vmem:[%s1 + $0x38] sm:$0xf]
    %v41 = vld [vmem:[%s1 + $0x3c] sm:$0xf]
    %v42 = vld [vmem:[%s2] sm:$0x1]
    %v43 = vlaneseq
    %v44 = vshrl.u32 %v43, 7
    %v45 = vsub.s32 0, %v44
    %v46 = vrot.slane %v42, %v45
    %v63 = vunpack.c.l.b16 %v26
    %v64 = vunpack.c.l.b16 %v27
    %v65 = vunpack.c.l.b16 %v28
    %v66 = vunpack.c.l.b16 %v29
    %v67 = vunpack.c.l.b16 %v30
    %v68 = vunpack.c.l.b16 %v31
    %v69 = vunpack.c.l.b16 %v32
    %v70 = vunpack.c.l.b16 %v33
    %v71 = vunpack.c.l.b16 %v34
    %v72 = vunpack.c.l.b16 %v35
    %v73 = vunpack.c.l.b16 %v36
    %v74 = vunpack.c.l.b16 %v37
    %v75 = vunpack.c.l.b16 %v38
    %v76 = vunpack.c.l.b16 %v39
    %v77 = vunpack.c.l.b16 %v40
    %v78 = vunpack.c.l.b16 %v41
    %v79 = vpack.c.b16 %v64, %v63
    %v80 = vpack.c.b16 %v66, %v65
    %v81 = vpack.c.b16 %v68, %v67
    %v82 = vpack.c.b16 %v70, %v69
    %v83 = vpack.c.b16 %v72, %v71
    %v84 = vpack.c.b16 %v74, %v73
    %v85 = vpack.c.b16 %v76, %v75
    %v86 = vpack.c.b16 %v78, %v77
    %95 = vmatprep.subr.bf16.mxu0 0
    %96 = vmatpush1.bf16.msra.mxu0 %v86
    %97 = vmatprep.subr.bf16.mxu0 0
    %98 = vmatpush1.bf16.msra.mxu0 %v85
    %99 = vmatprep.subr.bf16.mxu0 0
    %100 = vmatpush1.bf16.msra.mxu0 %v84
    %101 = vmatprep.subr.bf16.mxu0 0
    %102 = vmatpush1.bf16.msra.mxu0 %v83
    %103 = vmatprep.subr.bf16.mxu0 0
    %104 = vmatpush1.bf16.msra.mxu0 %v82
    %105 = vmatprep.subr.bf16.mxu0 0
    %106 = vmatpush1.bf16.msra.mxu0 %v81
    %107 = vmatprep.subr.bf16.mxu0 0
    %108 = vmatpush1.bf16.msra.mxu0 %v80
    %109 = vmatprep.subr.bf16.mxu0 0
    %110 = vmatpush1.bf16.msra.mxu0 %v79
    %111 = vmatprep.subr.bf16.mxu0 0
    %112 = vmatpush2.bf16.msra.mxu0 0
    %113 = vmatprep.subr.bf16.mxu0 0
    %114 = vmatpush2.bf16.msra.mxu0 0
    %115 = vmatprep.subr.bf16.mxu0 0
    %116 = vmatpush2.bf16.msra.mxu0 0
    %117 = vmatprep.subr.bf16.mxu0 0
    %118 = vmatpush2.bf16.msra.mxu0 0
    %119 = vmatprep.subr.bf16.mxu0 0
    %120 = vmatpush2.bf16.msra.mxu0 0
    %121 = vmatprep.subr.bf16.mxu0 0
    %122 = vmatpush2.bf16.msra.mxu0 0
    %123 = vmatprep.subr.bf16.mxu0 0
    %124 = vmatpush2.bf16.msra.mxu0 0
    %125 = vmatprep.subr.bf16.mxu0 0
    %126 = vmatpush2.bf16.msra.mxu0 0
    %127 = vmatprep.mubr.bf16.mxu0 0
    %128 = vmatmul.mubr.bf16.gmra.mxu0 %v23
    %v129 = vpop.f32.mrf.mxu0
    %v130 = vadd.f32 %v46, %v129
    %v131 = vpop.f32.mrf.mxu0
    %v132 = vpop.f32.mrf.mxu0
    %v133 = vpop.f32.mrf.mxu0
    %134 = vdwg.mxu0
    %s135 = scalar_lea.vmem %s1, 64
    %v136 = vld [vmem:[%s135] sm:$0xf]
    %v137 = vld [vmem:[%s135 + $0x4] sm:$0xf]
    %v138 = vld [vmem:[%s135 + $0x8] sm:$0xf]
    %v139 = vld [vmem:[%s135 + $0xc] sm:$0xf]
    %v140 = vld [vmem:[%s135 + $0x10] sm:$0xf]
    %v141 = vld [vmem:[%s135 + $0x14] sm:$0xf]
    %v142 = vld [vmem:[%s135 + $0x18] sm:$0xf]
    %v143 = vld [vmem:[%s135 + $0x1c] sm:$0xf]
    %v144 = vld [vmem:[%s135 + $0x20] sm:$0xf]
    %v145 = vld [vmem:[%s135 + $0x24] sm:$0xf]
    %v146 = vld [vmem:[%s135 + $0x28] sm:$0xf]
    %v147 = vld [vmem:[%s135 + $0x2c] sm:$0xf]
    %v148 = vld [vmem:[%s135 + $0x30] sm:$0xf]
    %v149 = vld [vmem:[%s135 + $0x34] sm:$0xf]
    %v150 = vld [vmem:[%s135 + $0x38] sm:$0xf]
    %v151 = vld [vmem:[%s135 + $0x3c] sm:$0xf]
    %v152 = vld [vmem:[%s2 + $0x1] sm:$0x1]
    %v153 = vlaneseq
    %v154 = vshrl.u32 %v153, 7
    %v155 = vsub.s32 0, %v154
    %v156 = vrot.slane %v152, %v155
    %v173 = vunpack.c.l.b16 %v136
    %v174 = vunpack.c.l.b16 %v137
    %v175 = vunpack.c.l.b16 %v138
    %v176 = vunpack.c.l.b16 %v139
    %v177 = vunpack.c.l.b16 %v140
    %v178 = vunpack.c.l.b16 %v141
    %v179 = vunpack.c.l.b16 %v142
    %v180 = vunpack.c.l.b16 %v143
    %v181 = vunpack.c.l.b16 %v144
    %v182 = vunpack.c.l.b16 %v145
    %v183 = vunpack.c.l.b16 %v146
    %v184 = vunpack.c.l.b16 %v147
    %v185 = vunpack.c.l.b16 %v148
    %v186 = vunpack.c.l.b16 %v149
    %v187 = vunpack.c.l.b16 %v150
    %v188 = vunpack.c.l.b16 %v151
    %v189 = vpack.c.b16 %v174, %v173
    %v190 = vpack.c.b16 %v176, %v175
    %v191 = vpack.c.b16 %v178, %v177
    %v192 = vpack.c.b16 %v180, %v179
    %v193 = vpack.c.b16 %v182, %v181
    %v194 = vpack.c.b16 %v184, %v183
    %v195 = vpack.c.b16 %v186, %v185
    %v196 = vpack.c.b16 %v188, %v187
    %205 = vmatprep.subr.bf16.mxu0 0
    %206 = vmatpush1.bf16.msra.mxu0 %v196
    %207 = vmatprep.subr.bf16.mxu0 0
    %208 = vmatpush1.bf16.msra.mxu0 %v195
    %209 = vmatprep.subr.bf16.mxu0 0
    %210 = vmatpush1.bf16.msra.mxu0 %v194
    %211 = vmatprep.subr.bf16.mxu0 0
    %212 = vmatpush1.bf16.msra.mxu0 %v193
    %213 = vmatprep.subr.bf16.mxu0 0
    %214 = vmatpush1.bf16.msra.mxu0 %v192
    %215 = vmatprep.subr.bf16.mxu0 0
    %216 = vmatpush1.bf16.msra.mxu0 %v191
    %217 = vmatprep.subr.bf16.mxu0 0
    %218 = vmatpush1.bf16.msra.mxu0 %v190
    %219 = vmatprep.subr.bf16.mxu0 0
    %220 = vmatpush1.bf16.msra.mxu0 %v189
    %221 = vmatprep.subr.bf16.mxu0 0
    %222 = vmatpush2.bf16.msra.mxu0 0
    %223 = vmatprep.subr.bf16.mxu0 0
    %224 = vmatpush2.bf16.msra.mxu0 0
    %225 = vmatprep.subr.bf16.mxu0 0
    %226 = vmatpush2.bf16.msra.mxu0 0
    %227 = vmatprep.subr.bf16.mxu0 0
    %228 = vmatpush2.bf16.msra.mxu0 0
    %229 = vmatprep.subr.bf16.mxu0 0
    %230 = vmatpush2.bf16.msra.mxu0 0
    %231 = vmatprep.subr.bf16.mxu0 0
    %232 = vmatpush2.bf16.msra.mxu0 0
    %233 = vmatprep.subr.bf16.mxu0 0
    %234 = vmatpush2.bf16.msra.mxu0 0
    %235 = vmatprep.subr.bf16.mxu0 0
    %236 = vmatpush2.bf16.msra.mxu0 0
    %237 = vmatprep.mubr.bf16.mxu0 0
    %238 = vmatmul.mubr.bf16.gmra.mxu0 %v25
    %v239 = vpop.f32.mrf.mxu0
    %v240 = vadd.f32 %v156, %v239
    %v241 = vpop.f32.mrf.mxu0
    %v242 = vpop.f32.mrf.mxu0
    %v243 = vpop.f32.mrf.mxu0
    %244 = vdwg.mxu0
    %v245 = vrsqrt.pop %v240
    %v246 = vmul.f32 %v240, %v245
    %vm247 = vcmp.eq.f32.partialorder %v240, inf
    %v248 = vsel %vm247, %v240, %v246
    %vm249 = vcmp.eq.f32.partialorder %v240, 0.0
    %v250 = vand.u32 %v240, 2147483648
    %v251 = vsel %vm249, %v250, %v248
    %v252 = vld [vmem:[%s2 + $0x2] sm:$0x1]
    %v253 = vlaneseq
    %v254 = vshrl.u32 %v253, 7
    %v255 = vsub.s32 0, %v254
    %v256 = vrot.slane %v252, %v255
    %v257 = vmul.f32 %v251, %v256
    %v258 = vadd.f32 %v130, %v257
    %v259 = vmax.f32 %v258, 0.0
    %v260 = vpack.c.bf16 %v259, %v259
    %v261 = vmul.f32 %v259, %v259
    %v262 = vpack.c.bf16 %v261, %v261
    %v263 = vld [vmem:[%s3] sm:$0xf]
    %v264 = vld [vmem:[%s3 + $0x4] sm:$0xf]
    %v265 = vld [vmem:[%s3 + $0x8] sm:$0xf]
    %v266 = vld [vmem:[%s3 + $0xc] sm:$0xf]
    %v267 = vld [vmem:[%s3 + $0x10] sm:$0xf]
    %v268 = vld [vmem:[%s3 + $0x14] sm:$0xf]
    %v269 = vld [vmem:[%s3 + $0x18] sm:$0xf]
    %v270 = vld [vmem:[%s3 + $0x1c] sm:$0xf]
    %v271 = vld [vmem:[%s3 + $0x20] sm:$0xf]
    %v272 = vld [vmem:[%s3 + $0x24] sm:$0xf]
    %v273 = vld [vmem:[%s3 + $0x28] sm:$0xf]
    %v274 = vld [vmem:[%s3 + $0x2c] sm:$0xf]
    %v275 = vld [vmem:[%s3 + $0x30] sm:$0xf]
    %v276 = vld [vmem:[%s3 + $0x34] sm:$0xf]
    %v277 = vld [vmem:[%s3 + $0x38] sm:$0xf]
    %v278 = vld [vmem:[%s3 + $0x3c] sm:$0xf]
    %v279 = vld [vmem:[%s4] sm:$0x1]
    %v280 = vlaneseq
    %v281 = vshrl.u32 %v280, 7
    %v282 = vsub.s32 0, %v281
    %v283 = vrot.slane %v279, %v282
    %v300 = vunpack.c.l.b16 %v263
    %v301 = vunpack.c.l.b16 %v264
    %v302 = vunpack.c.l.b16 %v265
    %v303 = vunpack.c.l.b16 %v266
    %v304 = vunpack.c.l.b16 %v267
    %v305 = vunpack.c.l.b16 %v268
    %v306 = vunpack.c.l.b16 %v269
    %v307 = vunpack.c.l.b16 %v270
    %v308 = vunpack.c.l.b16 %v271
    %v309 = vunpack.c.l.b16 %v272
    %v310 = vunpack.c.l.b16 %v273
    %v311 = vunpack.c.l.b16 %v274
    %v312 = vunpack.c.l.b16 %v275
    %v313 = vunpack.c.l.b16 %v276
    %v314 = vunpack.c.l.b16 %v277
    %v315 = vunpack.c.l.b16 %v278
    %v316 = vpack.c.b16 %v301, %v300
    %v317 = vpack.c.b16 %v303, %v302
    %v318 = vpack.c.b16 %v305, %v304
    %v319 = vpack.c.b16 %v307, %v306
    %v320 = vpack.c.b16 %v309, %v308
    %v321 = vpack.c.b16 %v311, %v310
    %v322 = vpack.c.b16 %v313, %v312
    %v323 = vpack.c.b16 %v315, %v314
    %332 = vmatprep.subr.bf16.mxu0 0
    %333 = vmatpush1.bf16.msra.mxu0 %v323
    %334 = vmatprep.subr.bf16.mxu0 0
    %335 = vmatpush1.bf16.msra.mxu0 %v322
    %336 = vmatprep.subr.bf16.mxu0 0
    %337 = vmatpush1.bf16.msra.mxu0 %v321
    %338 = vmatprep.subr.bf16.mxu0 0
    %339 = vmatpush1.bf16.msra.mxu0 %v320
    %340 = vmatprep.subr.bf16.mxu0 0
    %341 = vmatpush1.bf16.msra.mxu0 %v319
    %342 = vmatprep.subr.bf16.mxu0 0
    %343 = vmatpush1.bf16.msra.mxu0 %v318
    %344 = vmatprep.subr.bf16.mxu0 0
    %345 = vmatpush1.bf16.msra.mxu0 %v317
    %346 = vmatprep.subr.bf16.mxu0 0
    %347 = vmatpush1.bf16.msra.mxu0 %v316
    %348 = vmatprep.subr.bf16.mxu0 0
    %349 = vmatpush2.bf16.msra.mxu0 0
    %350 = vmatprep.subr.bf16.mxu0 0
    %351 = vmatpush2.bf16.msra.mxu0 0
    %352 = vmatprep.subr.bf16.mxu0 0
    %353 = vmatpush2.bf16.msra.mxu0 0
    %354 = vmatprep.subr.bf16.mxu0 0
    %355 = vmatpush2.bf16.msra.mxu0 0
    %356 = vmatprep.subr.bf16.mxu0 0
    %357 = vmatpush2.bf16.msra.mxu0 0
    %358 = vmatprep.subr.bf16.mxu0 0
    %359 = vmatpush2.bf16.msra.mxu0 0
    %360 = vmatprep.subr.bf16.mxu0 0
    %361 = vmatpush2.bf16.msra.mxu0 0
    %362 = vmatprep.subr.bf16.mxu0 0
    %363 = vmatpush2.bf16.msra.mxu0 0
    %364 = vmatprep.mubr.bf16.mxu0 0
    %365 = vmatmul.mubr.bf16.gmra.mxu0 %v260
    %v366 = vpop.f32.mrf.mxu0
    %v367 = vadd.f32 %v283, %v366
    %v368 = vpop.f32.mrf.mxu0
    %v369 = vpop.f32.mrf.mxu0
    %v370 = vpop.f32.mrf.mxu0
    %371 = vdwg.mxu0
    %s372 = scalar_lea.vmem %s3, 64
    %v373 = vld [vmem:[%s372] sm:$0xf]
    %v374 = vld [vmem:[%s372 + $0x4] sm:$0xf]
    %v375 = vld [vmem:[%s372 + $0x8] sm:$0xf]
    %v376 = vld [vmem:[%s372 + $0xc] sm:$0xf]
    %v377 = vld [vmem:[%s372 + $0x10] sm:$0xf]
    %v378 = vld [vmem:[%s372 + $0x14] sm:$0xf]
    %v379 = vld [vmem:[%s372 + $0x18] sm:$0xf]
    %v380 = vld [vmem:[%s372 + $0x1c] sm:$0xf]
    %v381 = vld [vmem:[%s372 + $0x20] sm:$0xf]
    %v382 = vld [vmem:[%s372 + $0x24] sm:$0xf]
    %v383 = vld [vmem:[%s372 + $0x28] sm:$0xf]
    %v384 = vld [vmem:[%s372 + $0x2c] sm:$0xf]
    %v385 = vld [vmem:[%s372 + $0x30] sm:$0xf]
    %v386 = vld [vmem:[%s372 + $0x34] sm:$0xf]
    %v387 = vld [vmem:[%s372 + $0x38] sm:$0xf]
    %v388 = vld [vmem:[%s372 + $0x3c] sm:$0xf]
    %v389 = vld [vmem:[%s4 + $0x1] sm:$0x1]
    %v390 = vlaneseq
    %v391 = vshrl.u32 %v390, 7
    %v392 = vsub.s32 0, %v391
    %v393 = vrot.slane %v389, %v392
    %v410 = vunpack.c.l.b16 %v373
    %v411 = vunpack.c.l.b16 %v374
    %v412 = vunpack.c.l.b16 %v375
    %v413 = vunpack.c.l.b16 %v376
    %v414 = vunpack.c.l.b16 %v377
    %v415 = vunpack.c.l.b16 %v378
    %v416 = vunpack.c.l.b16 %v379
    %v417 = vunpack.c.l.b16 %v380
    %v418 = vunpack.c.l.b16 %v381
    %v419 = vunpack.c.l.b16 %v382
    %v420 = vunpack.c.l.b16 %v383
    %v421 = vunpack.c.l.b16 %v384
    %v422 = vunpack.c.l.b16 %v385
    %v423 = vunpack.c.l.b16 %v386
    %v424 = vunpack.c.l.b16 %v387
    %v425 = vunpack.c.l.b16 %v388
    %v426 = vpack.c.b16 %v411, %v410
    %v427 = vpack.c.b16 %v413, %v412
    %v428 = vpack.c.b16 %v415, %v414
    %v429 = vpack.c.b16 %v417, %v416
    %v430 = vpack.c.b16 %v419, %v418
    %v431 = vpack.c.b16 %v421, %v420
    %v432 = vpack.c.b16 %v423, %v422
    %v433 = vpack.c.b16 %v425, %v424
    %442 = vmatprep.subr.bf16.mxu0 0
    %443 = vmatpush1.bf16.msra.mxu0 %v433
    %444 = vmatprep.subr.bf16.mxu0 0
    %445 = vmatpush1.bf16.msra.mxu0 %v432
    %446 = vmatprep.subr.bf16.mxu0 0
    %447 = vmatpush1.bf16.msra.mxu0 %v431
    %448 = vmatprep.subr.bf16.mxu0 0
    %449 = vmatpush1.bf16.msra.mxu0 %v430
    %450 = vmatprep.subr.bf16.mxu0 0
    %451 = vmatpush1.bf16.msra.mxu0 %v429
    %452 = vmatprep.subr.bf16.mxu0 0
    %453 = vmatpush1.bf16.msra.mxu0 %v428
    %454 = vmatprep.subr.bf16.mxu0 0
    %455 = vmatpush1.bf16.msra.mxu0 %v427
    %456 = vmatprep.subr.bf16.mxu0 0
    %457 = vmatpush1.bf16.msra.mxu0 %v426
    %458 = vmatprep.subr.bf16.mxu0 0
    %459 = vmatpush2.bf16.msra.mxu0 0
    %460 = vmatprep.subr.bf16.mxu0 0
    %461 = vmatpush2.bf16.msra.mxu0 0
    %462 = vmatprep.subr.bf16.mxu0 0
    %463 = vmatpush2.bf16.msra.mxu0 0
    %464 = vmatprep.subr.bf16.mxu0 0
    %465 = vmatpush2.bf16.msra.mxu0 0
    %466 = vmatprep.subr.bf16.mxu0 0
    %467 = vmatpush2.bf16.msra.mxu0 0
    %468 = vmatprep.subr.bf16.mxu0 0
    %469 = vmatpush2.bf16.msra.mxu0 0
    %470 = vmatprep.subr.bf16.mxu0 0
    %471 = vmatpush2.bf16.msra.mxu0 0
    %472 = vmatprep.subr.bf16.mxu0 0
    %473 = vmatpush2.bf16.msra.mxu0 0
    %474 = vmatprep.mubr.bf16.mxu0 0
    %475 = vmatmul.mubr.bf16.gmra.mxu0 %v262
    %v476 = vpop.f32.mrf.mxu0
    %v477 = vadd.f32 %v393, %v476
    %v478 = vpop.f32.mrf.mxu0
    %v479 = vpop.f32.mrf.mxu0
    %v480 = vpop.f32.mrf.mxu0
    %481 = vdwg.mxu0
    %v482 = vrsqrt.pop %v477
    %v483 = vmul.f32 %v477, %v482
    %vm484 = vcmp.eq.f32.partialorder %v477, inf
    %v485 = vsel %vm484, %v477, %v483
    %vm486 = vcmp.eq.f32.partialorder %v477, 0.0
    %v487 = vand.u32 %v477, 2147483648
    %v488 = vsel %vm486, %v487, %v485
    %v489 = vld [vmem:[%s4 + $0x2] sm:$0x1]
    %v490 = vlaneseq
    %v491 = vshrl.u32 %v490, 7
    %v492 = vsub.s32 0, %v491
    %v493 = vrot.slane %v489, %v492
    %v494 = vmul.f32 %v488, %v493
    %v495 = vadd.f32 %v367, %v494
    %v496 = vmul.f32 %v495, 0.5
    %v497 = vtanh.pop %v496
    %v498 = vmul.f32 %v497, 0.5
    %v499 = vadd.f32 %v498, 0.5
    %500 = vst [vmem:[#allocation2] sm:$0xff] %v499
    // Predicated region
    $region22: #{bnn_forward.1} parent=1 // pred_check
      _
    $region23: #{bnn_forward.1} parent=1 // pred_check_branch
      %502 = sbr.rel (0) target = $region25
    $region24: #{bnn_forward.1} parent=1 // pred_region
      %s504 = ssub.s32 128, 128
      %505 = vsyncadd [#allocation3], %s504
      %s507 = sshll.u32 [#allocation2], 4
      %s508 = int_to_ptr.vmem [resolvable:$true] %s507
      %510 = dma.vmem_to_hbm [thread:$0]  %s508, 128, %s5, [#allocation3]
    $region25: #{bnn_forward.1} parent=1 // pred_fallthru
      _
    // Predicated region
    $region26: #{bnn_forward.1} parent=1 // pred_check
      _
    $region27: #{bnn_forward.1} parent=1 // pred_check_branch
      %512 = sbr.rel (0) target = $region29
    $region28: #{bnn_forward.1} parent=1 // pred_region
      %513 = dma.done [#allocation3], 128
    $region29: #{bnn_forward.1} parent=1 // pred_fallthru
      _
    %514 = vsyncpa [#allocation3], 1

</llo_original>
